<compile_context>
chip_gen: v6e
topology: v6e:2x2x1
jax: 0.10.0
libtpu: 0.0.40
codegen_flags: <defaults>
</compile_context>

<pallas_src>
import functools

import jax
import jax.numpy as jnp
from jax.experimental import pallas as pl
from jax.experimental.pallas import tpu as pltpu


# --------------------------------------------------------------------------- #
# Kernel
# --------------------------------------------------------------------------- #
def _loss_partials_kernel(x_ref, t_ref, out_ref, *, hw, chunk, n_chunks):
    """Per-grid-step partial sums (over Bt samples x C channels).

    x_ref   : (Bt, C, S, L) prediction block (input dtype)
    t_ref   : (Bt, 1, S, L) label block (not broadcast over C in HBM)
    out_ref : (1, 1, 128)   packed f32 partials: lane0=cc, lane1=kl, lane2=mse
    """
    f32 = jnp.float32
    x = x_ref[...].astype(f32)            # (Bt, C, S, L)  single cast, reused
    t = t_ref[...].astype(f32)            # (Bt, 1, S, L)
    inv_hw = 1.0 / hw

    # single-axis reductions only (lane first, then sublane, then leading dims)
    def stat(v):                           # (bt, r, S, L') -> (bt, r, 1, 1)
        return jnp.sum(jnp.sum(v, axis=3, keepdims=True), axis=2, keepdims=True)

    def tot11(v):                          # any 4-D -> (1, 1) total sum
        r = stat(v)
        r = jnp.sum(jnp.sum(r, axis=1, keepdims=True), axis=0, keepdims=True)
        return r.reshape(1, 1)

    # ----------------- phase 1: per-(sample, channel) moments ---------------
    s_x = stat(x)                          # (Bt, C, 1, 1)
    s_xx = stat(x * x)
    s_xt = stat(x * t)                     # t broadcast over the C axis
    s_t = stat(t)                          # (Bt, 1, 1, 1)
    s_tt = stat(t * t)
    x_max = jnp.max(jnp.max(x, axis=3, keepdims=True), axis=2, keepdims=True)

    # ----------------- CC from moments (instance_norm, eps=1e-5, biased) ----
    mx = s_x * inv_hw
    mt = s_t * inv_hw
    var_x = s_xx * inv_hw - mx * mx
    var_t = s_tt * inv_hw - mt * mt
    inv_sx = jax.lax.rsqrt(var_x + 1e-5)   # EUP
    inv_st = jax.lax.rsqrt(var_t + 1e-5)
    num = (s_xt - hw * (mx * mt)) * (inv_sx * inv_st)
    osq = (s_xx - hw * (mx * mx)) * (inv_sx * inv_sx)
    tsq = (s_tt - hw * (mt * mt)) * (inv_st * inv_st)
    cc_sum = tot11(num / (jnp.sqrt(osq * tsq) + 1e-6))       # (1, 1)

    # ----------------- phase 2: symmetric KL + modulated MSE ----------------
    inv_xmax = 1.0 / x_max                 # (Bt, C, 1, 1) tiny divide
    inv_sum_xm = 1.0 / (s_x * inv_xmax)    # (Bt, C, 1, 1) == 1 / sum(x / x_max)
    inv_s_t = 1.0 / s_t                    # (Bt, 1, 1, 1)

    def phase2(xc, tc):
        xm = xc * inv_xmax                 # reused by KL and MSE
        xs = xm * inv_sum_xm
        ts = tc * inv_s_t
        inv_ts_eps = 1.0 / (ts + 1e-6)     # once per label element, reused by C
        a = ts * jnp.log(ts / (xs + 1e-6) + 1e-6)
        b = xs * jnp.log(xs * inv_ts_eps + 1e-6)
        kl = tot11(a + b)
        w = 1.0 / (1.1 - tc)               # once per label element
        d = xm - tc
        mse = tot11(d * d * w)
        return kl, mse

    if n_chunks == 1:
        # small tile: single shot, reuse the already-cast f32 x/t
        kl_sum, mse_sum = phase2(x, t)
    else:
        # large tile: lane-chunked loop bounds live f32 temporaries (v7x VMEM)
        def body(i, carry):
            kl_acc, mse_acc = carry
            off = pl.multiple_of(i * chunk, chunk)       # chunk % 128 == 0
            xc = x_ref[:, :, :, pl.ds(off, chunk)].astype(f32)
            tc = t_ref[:, :, :, pl.ds(off, chunk)].astype(f32)
            kl_c, mse_c = phase2(xc, tc)
            return kl_acc + kl_c, mse_acc + mse_c

        zero = jnp.zeros((1, 1), f32)
        kl_sum, mse_sum = jax.lax.fori_loop(0, n_chunks, body, (zero, zero))

    # ----------------- single lane-dense packed store -----------------------
    lane = jax.lax.broadcasted_iota(jnp.int32, (1, 128), 1)
    packed = (jnp.where(lane == 0, cc_sum, 0.0)
              + jnp.where(lane == 1, kl_sum, 0.0)
              + jnp.where(lane == 2, mse_sum, 0.0))
    out_ref[0] = packed


# --------------------------------------------------------------------------- #
# Wrapper-side sizing heuristics
# --------------------------------------------------------------------------- #
def _vmem_capacity_bytes():
    try:
        cap = getattr(pltpu.get_tpu_info(), "vmem_capacity_bytes", None)
        if cap:
            return int(cap)
    except Exception:
        pass
    return 64 << 20          # conservative fallback (v7x per-TensorCore)


def _choose_spatial_split(hw):
    """Split flattened HW -> (S, L) with L on the lane axis.

    Prefers S == 8 with L % 128 == 0 (fully dense vregs); otherwise picks the
    divisor pair with the best sublane*lane occupancy (tie-broken toward S=8).
    """
    best_key, best_sl = None, (1, hw)
    for s in (8, 16, 32, 4, 2, 1):
        if hw % s:
            continue
        l = hw // s
        sub_occ = s / float(((s + 7) // 8) * 8)
        lane_occ = l / float(((l + 127) // 128) * 128)
        key = (sub_occ * lane_occ, -abs(s - 8))
        if best_key is None or key > best_key:
            best_key, best_sl = key, (s, l)
    return best_sl


def _per_step_bytes(bt, c, s, l, chunk, in_itemsize):
    hw = s * l
    dma = 2 * bt * (c + 1) * hw * in_itemsize      # double-buffered input blocks
    ph1 = bt * (3 * c + 2) * hw * 4                # f32 casts + moment temporaries
    ph2 = 5 * bt * c * s * chunk * 4               # chunked KL/MSE temporaries
    return dma + ph1 + ph2


def _choose_chunk(l, bt, c, s, budget_bytes):
    """Lane-chunk for phase 2 so the ~5 live f32 temporaries stay under budget."""
    if l <= 128 or l % 128 != 0:
        return l
    col_bytes = 5 * bt * c * s * 4
    max_ck = max(128, budget_bytes // max(col_bytes, 1))
    ck = l
    while ck > max_ck:
        nxt = ck // 2
        if nxt < 128 or nxt % 128 != 0 or l % nxt != 0:
            break
        ck = nxt
    return ck


# --------------------------------------------------------------------------- #
# Public entry point
# --------------------------------------------------------------------------- #
def mod_mse_kl_cc_loss(output, label, prior=None,
                       kl_alpha=1.0, cc_alpha=1.0, mse_alpha=1.0):
    """Forward of ModMSE_KL_CC_Loss (scalar / non-dense branch)."""
    B, C, H, W = output.shape
    HW = H * W
    S, L = _choose_spatial_split(HW)

    # wrapper-side reshapes only (free in XLA; never reshape inside the kernel)
    x4 = output.reshape(B, C, S, L)
    lab = label if label.ndim == 4 else label[:, None]
    t4 = lab.reshape(B, 1, S, L)

    in_itemsize = jnp.dtype(output.dtype).itemsize
    budget = (_vmem_capacity_bytes() * 3) // 4     # ~96 MiB v5e/v6e, ~48 MiB v7x

    # Multi-sample blocking: amortize per-step overhead, but keep >= 2 grid
    # steps when B >= 2 so both v7x TensorCores get work.
    min_steps = 2 if B >= 2 else 1
    Bt = 1
    for cand in range(1, B + 1):
        if B % cand or (B // cand) < min_steps:
            continue
        if _per_step_bytes(cand, C, S, L, min(L, 2048), in_itemsize) <= budget:
            Bt = cand
    G = B // Bt

    chunk = _choose_chunk(L, Bt, C, S, budget // 6)
    n_chunks = L // chunk

    vmem_limit = int(min(budget,
                         max(_per_step_bytes(Bt, C, S, L, chunk, in_itemsize)
                             + (8 << 20),
                             16 << 20)))

    kernel = functools.partial(_loss_partials_kernel,
                               hw=HW, chunk=chunk, n_chunks=n_chunks)

    parts = pl.pallas_call(
        kernel,
        out_shape=jax.ShapeDtypeStruct((G, 1, 128), jnp.float32),
        grid_spec=pltpu.PrefetchScalarGridSpec(
            num_scalar_prefetch=0,
            grid=(G,),
            in_specs=[pl.BlockSpec((Bt, C, S, L), lambda g: (g, 0, 0, 0)),
                      pl.BlockSpec((Bt, 1, S, L), lambda g: (g, 0, 0, 0))],
            out_specs=pl.BlockSpec((1, 1, 128), lambda g: (g, 0, 0))),
        compiler_params=pltpu.CompilerParams(
            dimension_semantics=("parallel",),
            vmem_limit_bytes=vmem_limit),
    )(x4, t4)

    # final means + NaN guards (match PyTorch: guards on the reduced scalars)
    cc = jnp.sum(parts[:, 0, 0]) / (B * C)
    cc = jnp.where(jnp.isnan(cc) | (cc < 0.0), 0.0, cc)
    kl = jnp.sum(parts[:, 0, 1]) / (B * 2.0)
    kl = jnp.where(jnp.isnan(kl), 0.0, kl)
    mse = jnp.sum(parts[:, 0, 2]) / (B * C * HW)

    loss = kl * kl_alpha + (1.0 - cc) * cc_alpha + mse * mse_alpha

    if prior is not None:
        ph, pw = prior.shape[-2], prior.shape[-1]
        # trivial reduction: plain XLA is already at roofline, no 2nd kernel
        loss = loss + jnp.sum(prior.astype(jnp.float32) ** 2) / (ph * pw) / 100.0
    return loss


# --------------------------------------------------------------------------- #
# Pure-JAX reference (mirror of the PyTorch forward) for validation
# --------------------------------------------------------------------------- #
def _reference(output, label, prior, kl_alpha, cc_alpha, mse_alpha):
    B = output.shape[0]
    t = label[:, None] if label.ndim == 3 else label

    def inorm(v):
        m = v.mean(axis=(2, 3), keepdims=True)
        var = v.var(axis=(2, 3), keepdims=True)
        return (v - m) / jnp.sqrt(var + 1e-5)

    on, tn = inorm(output), inorm(t)
    num = (on * tn).sum(axis=(2, 3))
    osq = (on * on).sum(axis=(2, 3))
    tsq = (tn * tn).sum(axis=(2, 3))
    cc = (num / (jnp.sqrt(osq * tsq) + 1e-6)).mean()
    cc = jnp.where(jnp.isnan(cc) | (cc < 0), 0.0, cc)

    omax = output.max(axis=(2, 3), keepdims=True)
    o = output / omax
    o = o / o.sum(axis=(2, 3), keepdims=True)
    tt = t / t.sum(axis=(2, 3), keepdims=True)
    a = tt * jnp.log(tt / (o + 1e-6) + 1e-6)
    b = o * jnp.log(o / (tt + 1e-6) + 1e-6)
    kl = (a.sum() + b.sum()) / (B * 2.0)
    kl = jnp.where(jnp.isnan(kl), 0.0, kl)

    mse = jnp.mean((output / omax - t) ** 2 / (1.0 - t + 0.1))
    loss = kl * kl_alpha + (1.0 - cc) * cc_alpha + mse * mse_alpha
    if prior is not None:
        loss = loss + jnp.sum(prior ** 2 / (prior.shape[-1] * prior.shape[-2])) / 100.0
    return loss


if __name__ == "__main__":
    key = jax.random.PRNGKey(0)

    # cfg.LOSS.{KL_ALPHA, CC_ALPHA, MSE_ALPHA}
    KL_ALPHA, CC_ALPHA, MSE_ALPHA = 1.0, 2.0, 5.0

    cases = [
        # (B, C, H, W, with_prior)
        (2, 4, 32, 32, True),    # dense (8,128) spatial split, G=2 grid steps
        (4, 2, 16, 16, False),   # fallback (8,32) split, Bt=2 multi-sample block
        (1, 1, 16, 16, False),   # single sample / single channel edge case
    ]

    for idx, (B, C, H, W, with_prior) in enumerate(cases):
        k1, k2, k3 = jax.random.split(jax.random.fold_in(key, idx), 3)
        output = jax.random.uniform(k1, (B, C, H, W), jnp.float32, 0.01, 1.0)
        label = jax.random.uniform(k2, (B, H, W), jnp.float32, 0.0, 1.0)
        prior = (jax.random.uniform(k3, (B, 8, H, W), jnp.float32, -0.5, 0.5)
                 if with_prior else None)

        loss = mod_mse_kl_cc_loss(output, label, prior,
                                  kl_alpha=KL_ALPHA, cc_alpha=CC_ALPHA,
                                  mse_alpha=MSE_ALPHA)
        loss = jax.block_until_ready(loss)

        ref = _reference(output, label, prior, KL_ALPHA, CC_ALPHA, MSE_ALPHA)
        assert jnp.allclose(loss, ref, rtol=1e-4, atol=1e-4), \
            (idx, float(loss), float(ref))

    print("KERNEL_OK")
</pallas_src>

<mosaic_0001>
module attributes {stable_mosaic.version = 11 : i64} {
  func.func @_loss_partials_kernel(%arg0: i32, %arg1: memref<1x4x8x128xf32, #tpu.memory_space<vmem>>, %arg2: memref<1x1x8x128xf32, #tpu.memory_space<vmem>>, %arg3: memref<1x1x128xf32, #tpu.memory_space<vmem>>) attributes {dimension_semantics = [#tpu.dimension_semantics<parallel>], iteration_bounds = array<i64: 2>, scalar_prefetch = 0 : i64, scratch_operands = 0 : i64, tpu.core_type = #tpu.core_type<tc>, window_params = [{transform_indices = @transform_0, window_bounds = array<i64: 1, 4, 8, 128>}, {transform_indices = @transform_1, window_bounds = array<i64: 1, 1, 8, 128>}, {transform_indices = @transform_2, window_bounds = array<i64: 1, 1, 128>}]} {
    %c0 = arith.constant 0 : index
    %c0_0 = arith.constant 0 : index
    %c0_1 = arith.constant 0 : index
    %c0_2 = arith.constant 0 : index
    %0 = vector.load %arg1[%c0, %c0_0, %c0_1, %c0_2] : memref<1x4x8x128xf32, #tpu.memory_space<vmem>>, vector<1x4x8x128xf32>
    %c0_3 = arith.constant 0 : index
    %c0_4 = arith.constant 0 : index
    %c0_5 = arith.constant 0 : index
    %c0_6 = arith.constant 0 : index
    %1 = vector.load %arg2[%c0_3, %c0_4, %c0_5, %c0_6] : memref<1x1x8x128xf32, #tpu.memory_space<vmem>>, vector<1x1x8x128xf32>
    %cst = arith.constant dense<0.000000e+00> : vector<1x4x8xf32>
    %2 = vector.multi_reduction <add>, %0, %cst [3] : vector<1x4x8x128xf32> to vector<1x4x8xf32>
    %3 = vector.shape_cast %2 : vector<1x4x8xf32> to vector<1x4x8x1xf32>
    %cst_7 = arith.constant dense<0.000000e+00> : vector<1x4x1xf32>
    %4 = vector.multi_reduction <add>, %3, %cst_7 [2] : vector<1x4x8x1xf32> to vector<1x4x1xf32>
    %5 = vector.shape_cast %4 : vector<1x4x1xf32> to vector<1x4x1x1xf32>
    %6 = arith.mulf %0, %0 : vector<1x4x8x128xf32>
    %cst_8 = arith.constant dense<0.000000e+00> : vector<1x4x8xf32>
    %7 = vector.multi_reduction <add>, %6, %cst_8 [3] : vector<1x4x8x128xf32> to vector<1x4x8xf32>
    %8 = vector.shape_cast %7 : vector<1x4x8xf32> to vector<1x4x8x1xf32>
    %cst_9 = arith.constant dense<0.000000e+00> : vector<1x4x1xf32>
    %9 = vector.multi_reduction <add>, %8, %cst_9 [2] : vector<1x4x8x1xf32> to vector<1x4x1xf32>
    %10 = vector.shape_cast %9 : vector<1x4x1xf32> to vector<1x4x1x1xf32>
    %11 = vector.broadcast %1 : vector<1x1x8x128xf32> to vector<1x4x8x128xf32>
    %12 = arith.mulf %0, %11 : vector<1x4x8x128xf32>
    %cst_10 = arith.constant dense<0.000000e+00> : vector<1x4x8xf32>
    %13 = vector.multi_reduction <add>, %12, %cst_10 [3] : vector<1x4x8x128xf32> to vector<1x4x8xf32>
    %14 = vector.shape_cast %13 : vector<1x4x8xf32> to vector<1x4x8x1xf32>
    %cst_11 = arith.constant dense<0.000000e+00> : vector<1x4x1xf32>
    %15 = vector.multi_reduction <add>, %14, %cst_11 [2] : vector<1x4x8x1xf32> to vector<1x4x1xf32>
    %16 = vector.shape_cast %15 : vector<1x4x1xf32> to vector<1x4x1x1xf32>
    %cst_12 = arith.constant dense<0.000000e+00> : vector<1x1x8xf32>
    %17 = vector.multi_reduction <add>, %1, %cst_12 [3] : vector<1x1x8x128xf32> to vector<1x1x8xf32>
    %18 = vector.shape_cast %17 : vector<1x1x8xf32> to vector<1x1x8x1xf32>
    %cst_13 = arith.constant dense<0.000000e+00> : vector<1x1x1xf32>
    %19 = vector.multi_reduction <add>, %18, %cst_13 [2] : vector<1x1x8x1xf32> to vector<1x1x1xf32>
    %20 = vector.shape_cast %19 : vector<1x1x1xf32> to vector<1x1x1x1xf32>
    %21 = arith.mulf %1, %1 : vector<1x1x8x128xf32>
    %cst_14 = arith.constant dense<0.000000e+00> : vector<1x1x8xf32>
    %22 = vector.multi_reduction <add>, %21, %cst_14 [3] : vector<1x1x8x128xf32> to vector<1x1x8xf32>
    %23 = vector.shape_cast %22 : vector<1x1x8xf32> to vector<1x1x8x1xf32>
    %cst_15 = arith.constant dense<0.000000e+00> : vector<1x1x1xf32>
    %24 = vector.multi_reduction <add>, %23, %cst_15 [2] : vector<1x1x8x1xf32> to vector<1x1x1xf32>
    %25 = vector.shape_cast %24 : vector<1x1x1xf32> to vector<1x1x1x1xf32>
    %cst_16 = arith.constant dense<0xFF800000> : vector<1x4x8xf32>
    %26 = vector.multi_reduction <maximumf>, %0, %cst_16 [3] : vector<1x4x8x128xf32> to vector<1x4x8xf32>
    %27 = vector.shape_cast %26 : vector<1x4x8xf32> to vector<1x4x8x1xf32>
    %cst_17 = arith.constant dense<0xFF800000> : vector<1x4x1xf32>
    %28 = vector.multi_reduction <maximumf>, %27, %cst_17 [2] : vector<1x4x8x1xf32> to vector<1x4x1xf32>
    %29 = vector.shape_cast %28 : vector<1x4x1xf32> to vector<1x4x1x1xf32>
    %cst_18 = arith.constant 9.765625E-4 : f32
    %30 = vector.broadcast %cst_18 : f32 to vector<1x4x1x1xf32>
    %31 = arith.mulf %5, %30 : vector<1x4x1x1xf32>
    %cst_19 = arith.constant 9.765625E-4 : f32
    %32 = vector.broadcast %cst_19 : f32 to vector<1x1x1x1xf32>
    %33 = arith.mulf %20, %32 : vector<1x1x1x1xf32>
    %cst_20 = arith.constant 9.765625E-4 : f32
    %34 = vector.broadcast %cst_20 : f32 to vector<1x4x1x1xf32>
    %35 = arith.mulf %10, %34 : vector<1x4x1x1xf32>
    %36 = arith.mulf %31, %31 : vector<1x4x1x1xf32>
    %37 = arith.subf %35, %36 : vector<1x4x1x1xf32>
    %cst_21 = arith.constant 9.765625E-4 : f32
    %38 = vector.broadcast %cst_21 : f32 to vector<1x1x1x1xf32>
    %39 = arith.mulf %25, %38 : vector<1x1x1x1xf32>
    %40 = arith.mulf %33, %33 : vector<1x1x1x1xf32>
    %41 = arith.subf %39, %40 : vector<1x1x1x1xf32>
    %cst_22 = arith.constant 9.99999974E-6 : f32
    %42 = vector.broadcast %cst_22 : f32 to vector<1x4x1x1xf32>
    %43 = arith.addf %37, %42 : vector<1x4x1x1xf32>
    %44 = math.rsqrt %43 : vector<1x4x1x1xf32>
    %cst_23 = arith.constant 9.99999974E-6 : f32
    %45 = vector.broadcast %cst_23 : f32 to vector<1x1x1x1xf32>
    %46 = arith.addf %41, %45 : vector<1x1x1x1xf32>
    %47 = math.rsqrt %46 : vector<1x1x1x1xf32>
    %48 = vector.broadcast %33 : vector<1x1x1x1xf32> to vector<1x4x1x1xf32>
    %49 = arith.mulf %31, %48 : vector<1x4x1x1xf32>
    %cst_24 = arith.constant 1.024000e+03 : f32
    %50 = vector.broadcast %cst_24 : f32 to vector<1x4x1x1xf32>
    %51 = arith.mulf %50, %49 : vector<1x4x1x1xf32>
    %52 = arith.subf %16, %51 : vector<1x4x1x1xf32>
    %53 = vector.broadcast %47 : vector<1x1x1x1xf32> to vector<1x4x1x1xf32>
    %54 = arith.mulf %44, %53 : vector<1x4x1x1xf32>
    %55 = arith.mulf %52, %54 : vector<1x4x1x1xf32>
    %56 = arith.mulf %31, %31 : vector<1x4x1x1xf32>
    %cst_25 = arith.constant 1.024000e+03 : f32
    %57 = vector.broadcast %cst_25 : f32 to vector<1x4x1x1xf32>
    %58 = arith.mulf %57, %56 : vector<1x4x1x1xf32>
    %59 = arith.subf %10, %58 : vector<1x4x1x1xf32>
    %60 = arith.mulf %44, %44 : vector<1x4x1x1xf32>
    %61 = arith.mulf %59, %60 : vector<1x4x1x1xf32>
    %62 = arith.mulf %33, %33 : vector<1x1x1x1xf32>
    %cst_26 = arith.constant 1.024000e+03 : f32
    %63 = vector.broadcast %cst_26 : f32 to vector<1x1x1x1xf32>
    %64 = arith.mulf %63, %62 : vector<1x1x1x1xf32>
    %65 = arith.subf %25, %64 : vector<1x1x1x1xf32>
    %66 = arith.mulf %47, %47 : vector<1x1x1x1xf32>
    %67 = arith.mulf %65, %66 : vector<1x1x1x1xf32>
    %68 = vector.broadcast %67 : vector<1x1x1x1xf32> to vector<1x4x1x1xf32>
    %69 = arith.mulf %61, %68 : vector<1x4x1x1xf32>
    %70 = math.sqrt %69 : vector<1x4x1x1xf32>
    %cst_27 = arith.constant 9.99999997E-7 : f32
    %71 = vector.broadcast %cst_27 : f32 to vector<1x4x1x1xf32>
    %72 = arith.addf %70, %71 : vector<1x4x1x1xf32>
    %73 = arith.divf %55, %72 : vector<1x4x1x1xf32>
    %cst_28 = arith.constant dense<0.000000e+00> : vector<1x4x1xf32>
    %74 = vector.multi_reduction <add>, %73, %cst_28 [3] : vector<1x4x1x1xf32> to vector<1x4x1xf32>
    %75 = vector.shape_cast %74 : vector<1x4x1xf32> to vector<1x4x1x1xf32>
    %cst_29 = arith.constant dense<0.000000e+00> : vector<1x4x1xf32>
    %76 = vector.multi_reduction <add>, %75, %cst_29 [2] : vector<1x4x1x1xf32> to vector<1x4x1xf32>
    %77 = vector.shape_cast %76 : vector<1x4x1xf32> to vector<1x4x1x1xf32>
    %cst_30 = arith.constant dense<0.000000e+00> : vector<1x1x1xf32>
    %78 = vector.multi_reduction <add>, %77, %cst_30 [1] : vector<1x4x1x1xf32> to vector<1x1x1xf32>
    %79 = vector.shape_cast %78 : vector<1x1x1xf32> to vector<1x1x1x1xf32>
    %cst_31 = arith.constant dense<0.000000e+00> : vector<1x1x1xf32>
    %80 = vector.multi_reduction <add>, %79, %cst_31 [0] : vector<1x1x1x1xf32> to vector<1x1x1xf32>
    %81 = vector.shape_cast %80 : vector<1x1x1xf32> to vector<1x1x1x1xf32>
    %82 = vector.shape_cast %81 : vector<1x1x1x1xf32> to vector<1x1xf32>
    %cst_32 = arith.constant 1.000000e+00 : f32
    %83 = vector.broadcast %cst_32 : f32 to vector<1x4x1x1xf32>
    %84 = arith.divf %83, %29 : vector<1x4x1x1xf32>
    %85 = arith.mulf %5, %84 : vector<1x4x1x1xf32>
    %cst_33 = arith.constant 1.000000e+00 : f32
    %86 = vector.broadcast %cst_33 : f32 to vector<1x4x1x1xf32>
    %87 = arith.divf %86, %85 : vector<1x4x1x1xf32>
    %cst_34 = arith.constant 1.000000e+00 : f32
    %88 = vector.broadcast %cst_34 : f32 to vector<1x1x1x1xf32>
    %89 = arith.divf %88, %20 : vector<1x1x1x1xf32>
    %90 = vector.broadcast %84 : vector<1x4x1x1xf32> to vector<1x4x8x128xf32>
    %91 = arith.mulf %0, %90 : vector<1x4x8x128xf32>
    %92 = vector.broadcast %87 : vector<1x4x1x1xf32> to vector<1x4x8x128xf32>
    %93 = arith.mulf %91, %92 : vector<1x4x8x128xf32>
    %94 = vector.broadcast %89 : vector<1x1x1x1xf32> to vector<1x1x8x128xf32>
    %95 = arith.mulf %1, %94 : vector<1x1x8x128xf32>
    %cst_35 = arith.constant 9.99999997E-7 : f32
    %96 = vector.broadcast %cst_35 : f32 to vector<1x1x8x128xf32>
    %97 = arith.addf %95, %96 : vector<1x1x8x128xf32>
    %cst_36 = arith.constant 1.000000e+00 : f32
    %98 = vector.broadcast %cst_36 : f32 to vector<1x1x8x128xf32>
    %99 = arith.divf %98, %97 : vector<1x1x8x128xf32>
    %cst_37 = arith.constant 9.99999997E-7 : f32
    %100 = vector.broadcast %cst_37 : f32 to vector<1x4x8x128xf32>
    %101 = arith.addf %93, %100 : vector<1x4x8x128xf32>
    %102 = vector.broadcast %95 : vector<1x1x8x128xf32> to vector<1x4x8x128xf32>
    %103 = arith.divf %102, %101 : vector<1x4x8x128xf32>
    %cst_38 = arith.constant 9.99999997E-7 : f32
    %104 = vector.broadcast %cst_38 : f32 to vector<1x4x8x128xf32>
    %105 = arith.addf %103, %104 : vector<1x4x8x128xf32>
    %106 = math.log %105 : vector<1x4x8x128xf32>
    %107 = vector.broadcast %95 : vector<1x1x8x128xf32> to vector<1x4x8x128xf32>
    %108 = arith.mulf %107, %106 : vector<1x4x8x128xf32>
    %109 = vector.broadcast %99 : vector<1x1x8x128xf32> to vector<1x4x8x128xf32>
    %110 = arith.mulf %93, %109 : vector<1x4x8x128xf32>
    %cst_39 = arith.constant 9.99999997E-7 : f32
    %111 = vector.broadcast %cst_39 : f32 to vector<1x4x8x128xf32>
    %112 = arith.addf %110, %111 : vector<1x4x8x128xf32>
    %113 = math.log %112 : vector<1x4x8x128xf32>
    %114 = arith.mulf %93, %113 : vector<1x4x8x128xf32>
    %115 = arith.addf %108, %114 : vector<1x4x8x128xf32>
    %cst_40 = arith.constant dense<0.000000e+00> : vector<1x4x8xf32>
    %116 = vector.multi_reduction <add>, %115, %cst_40 [3] : vector<1x4x8x128xf32> to vector<1x4x8xf32>
    %117 = vector.shape_cast %116 : vector<1x4x8xf32> to vector<1x4x8x1xf32>
    %cst_41 = arith.constant dense<0.000000e+00> : vector<1x4x1xf32>
    %118 = vector.multi_reduction <add>, %117, %cst_41 [2] : vector<1x4x8x1xf32> to vector<1x4x1xf32>
    %119 = vector.shape_cast %118 : vector<1x4x1xf32> to vector<1x4x1x1xf32>
    %cst_42 = arith.constant dense<0.000000e+00> : vector<1x1x1xf32>
    %120 = vector.multi_reduction <add>, %119, %cst_42 [1] : vector<1x4x1x1xf32> to vector<1x1x1xf32>
    %121 = vector.shape_cast %120 : vector<1x1x1xf32> to vector<1x1x1x1xf32>
    %cst_43 = arith.constant dense<0.000000e+00> : vector<1x1x1xf32>
    %122 = vector.multi_reduction <add>, %121, %cst_43 [0] : vector<1x1x1x1xf32> to vector<1x1x1xf32>
    %123 = vector.shape_cast %122 : vector<1x1x1xf32> to vector<1x1x1x1xf32>
    %124 = vector.shape_cast %123 : vector<1x1x1x1xf32> to vector<1x1xf32>
    %cst_44 = arith.constant 1.100000e+00 : f32
    %125 = vector.broadcast %cst_44 : f32 to vector<1x1x8x128xf32>
    %126 = arith.subf %125, %1 : vector<1x1x8x128xf32>
    %cst_45 = arith.constant 1.000000e+00 : f32
    %127 = vector.broadcast %cst_45 : f32 to vector<1x1x8x128xf32>
    %128 = arith.divf %127, %126 : vector<1x1x8x128xf32>
    %129 = vector.broadcast %1 : vector<1x1x8x128xf32> to vector<1x4x8x128xf32>
    %130 = arith.subf %91, %129 : vector<1x4x8x128xf32>
    %131 = arith.mulf %130, %130 : vector<1x4x8x128xf32>
    %132 = vector.broadcast %128 : vector<1x1x8x128xf32> to vector<1x4x8x128xf32>
    %133 = arith.mulf %131, %132 : vector<1x4x8x128xf32>
    %cst_46 = arith.constant dense<0.000000e+00> : vector<1x4x8xf32>
    %134 = vector.multi_reduction <add>, %133, %cst_46 [3] : vector<1x4x8x128xf32> to vector<1x4x8xf32>
    %135 = vector.shape_cast %134 : vector<1x4x8xf32> to vector<1x4x8x1xf32>
    %cst_47 = arith.constant dense<0.000000e+00> : vector<1x4x1xf32>
    %136 = vector.multi_reduction <add>, %135, %cst_47 [2] : vector<1x4x8x1xf32> to vector<1x4x1xf32>
    %137 = vector.shape_cast %136 : vector<1x4x1xf32> to vector<1x4x1x1xf32>
    %cst_48 = arith.constant dense<0.000000e+00> : vector<1x1x1xf32>
    %138 = vector.multi_reduction <add>, %137, %cst_48 [1] : vector<1x4x1x1xf32> to vector<1x1x1xf32>
    %139 = vector.shape_cast %138 : vector<1x1x1xf32> to vector<1x1x1x1xf32>
    %cst_49 = arith.constant dense<0.000000e+00> : vector<1x1x1xf32>
    %140 = vector.multi_reduction <add>, %139, %cst_49 [0] : vector<1x1x1x1xf32> to vector<1x1x1xf32>
    %141 = vector.shape_cast %140 : vector<1x1x1xf32> to vector<1x1x1x1xf32>
    %142 = vector.shape_cast %141 : vector<1x1x1x1xf32> to vector<1x1xf32>
    %143 = tpu.iota {dimensions = array<i32: 1>} : vector<1x128xi32>
    %c0_i32 = arith.constant 0 : i32
    %144 = vector.broadcast %c0_i32 : i32 to vector<1x128xi32>
    %145 = arith.cmpi eq, %143, %144 : vector<1x128xi32>
    %cst_50 = arith.constant 0.000000e+00 : f32
    %146 = vector.shape_cast %82 : vector<1x1xf32> to vector<1x1xf32>
    %147 = vector.broadcast %146 : vector<1x1xf32> to vector<1x128xf32>
    %148 = vector.broadcast %cst_50 : f32 to vector<1x128xf32>
    %149 = arith.select %145, %147, %148 : vector<1x128xi1>, vector<1x128xf32>
    %c1_i32 = arith.constant 1 : i32
    %150 = vector.broadcast %c1_i32 : i32 to vector<1x128xi32>
    %151 = arith.cmpi eq, %143, %150 : vector<1x128xi32>
    %cst_51 = arith.constant 0.000000e+00 : f32
    %152 = vector.shape_cast %124 : vector<1x1xf32> to vector<1x1xf32>
    %153 = vector.broadcast %152 : vector<1x1xf32> to vector<1x128xf32>
    %154 = vector.broadcast %cst_51 : f32 to vector<1x128xf32>
    %155 = arith.select %151, %153, %154 : vector<1x128xi1>, vector<1x128xf32>
    %156 = arith.addf %149, %155 : vector<1x128xf32>
    %c2_i32 = arith.constant 2 : i32
    %157 = vector.broadcast %c2_i32 : i32 to vector<1x128xi32>
    %158 = arith.cmpi eq, %143, %157 : vector<1x128xi32>
    %cst_52 = arith.constant 0.000000e+00 : f32
    %159 = vector.shape_cast %142 : vector<1x1xf32> to vector<1x1xf32>
    %160 = vector.broadcast %159 : vector<1x1xf32> to vector<1x128xf32>
    %161 = vector.broadcast %cst_52 : f32 to vector<1x128xf32>
    %162 = arith.select %158, %160, %161 : vector<1x128xi1>, vector<1x128xf32>
    %163 = arith.addf %156, %162 : vector<1x128xf32>
    %c0_53 = arith.constant 0 : index
    %c0_54 = arith.constant 0 : index
    %c0_55 = arith.constant 0 : index
    %164 = vector.load %arg3[%c0_53, %c0_54, %c0_55] : memref<1x1x128xf32, #tpu.memory_space<vmem>>, vector<1x1x128xf32>
    %165 = vector.shape_cast %164 : vector<1x1x128xf32> to vector<1x128xf32>
    %166 = vector.shape_cast %163 : vector<1x128xf32> to vector<1x1x128xf32>
    tpu.vector_store %arg3[%c0_53, %c0_54, %c0_55], %166 {strides = array<i32>} : memref<1x1x128xf32, #tpu.memory_space<vmem>>, vector<1x1x128xf32>,
    return
  }
  func.func @transform_0(%arg0: i32) -> (i32, i32, i32, i32) {
    %c0_i32 = arith.constant 0 : i32
    %c0_i32_0 = arith.constant 0 : i32
    %c0_i32_1 = arith.constant 0 : i32
    %c0_i32_2 = arith.constant 0 : i32
    return %arg0, %c0_i32, %c0_i32_0, %c0_i32_1 : i32, i32, i32, i32
  }
  func.func @transform_1(%arg0: i32) -> (i32, i32, i32, i32) {
    %c0_i32 = arith.constant 0 : i32
    %c0_i32_0 = arith.constant 0 : i32
    %c0_i32_1 = arith.constant 0 : i32
    %c0_i32_2 = arith.constant 0 : i32
    return %arg0, %c0_i32, %c0_i32_0, %c0_i32_1 : i32, i32, i32, i32
  }
  func.func @transform_2(%arg0: i32) -> (i32, i32, i32) {
    %c0_i32 = arith.constant 0 : i32
    %c0_i32_0 = arith.constant 0 : i32
    %c0_i32_1 = arith.constant 0 : i32
    return %arg0, %c0_i32, %c0_i32_0 : i32, i32, i32
  }
}

</mosaic_0001>

<llo_original>
// kernel: tpu_custom_call.1
$region0: #{tpu_custom_call.1}
  #allocation0 [shape = 'u32[]', space=smem, size = 0x4, offset = 0x4, fixed_abs, tag = 'smem constant byte address 0x4 - core index']
  #allocation1 [shape = 'u32[144,128]{1,0:T(1,128)}', space=vmem, size = 0x12000, scoped, tag = 'internal scratch']
  %s0 = inlined_call_operand.hbm [shape: f32[2,4,8,128], index: 0, kind: input, shape index: {}]
  %s1 = inlined_call_operand.hbm [shape: f32[2,1,8,128], index: 1, kind: input, shape index: {}]
  %s2 = inlined_call_operand.hbm [shape: f32[2,1,128], index: 2, kind: output, shape index: {}]
  %s3 = sld [smem:[#allocation0]]
  $region49: #{tpu_custom_call.1} parent=0
    _
  %s5 = ssub.s32 1, %s3
  %s6 = scalar_select 0, %s5, %s3
  $region1: #{tpu_custom_call.1} parent=0
    #allocation2 [shape = 'u8[32768]{0}', space=vmem, size = 0x8000, scoped, tag = 'input window, operand 0']
    #allocation3 [shape = 's32[2]{0}', space=sflag, size = 0x8, scoped, tag = 'scoped memory for tpu_custom_call.1']
    #allocation4 [shape = 's32[2]{0}', space=sflag, size = 0x8, scoped, tag = 'scoped memory for tpu_custom_call.1']
    #allocation5 [shape = 'u8[8192]{0}', space=vmem, size = 0x2000, scoped, tag = 'input window, operand 1']
    #allocation6 [shape = 's32[2]{0}', space=sflag, size = 0x8, scoped, tag = 'scoped memory for tpu_custom_call.1']
    #allocation7 [shape = 'u8[1024]{0}', space=vmem, size = 0x400, scoped, tag = 'output window, operand 0']
    %7 = vsyncpa [#allocation3], 0
    %s8 = scalar_lea.sflag [#allocation3], 1
    %9 = vsyncpa %s8, 0
    %10 = vsyncpa [#allocation6], 0
    %s11 = scalar_lea.sflag [#allocation6], 1
    %12 = vsyncpa %s11, 0
    %13 = vsyncpa [#allocation4], 0
    %s14 = scalar_lea.sflag [#allocation4], 1
    %15 = vsyncpa %s14, 0
    loop: start=0, step=1, limit=4
    $region2: #{tpu_custom_call.1} parent=1 // loop_pre_header
      _
    $region3: #{tpu_custom_call.1} parent=1 // loop_header
      %s17 = sphi 0, %s21
      %p18 = scmp.ge.s32.totalorder %s17, 4
      %s27 = sphi 0, %s29
      %s30 = sphi 0, %s27
      %s31 = sphi 0, %s30
      %s47 = sphi 0, %s31
      %s53 = sphi 0, %s55
      %s56 = sphi 0, %s53
      %s57 = sphi 0, %s56
      %s73 = sphi 0, %s57
      %s79 = sphi 0, %s81
      %s82 = sphi 0, %s79
      %s83 = sphi 0, %s82
      %s99 = sphi 0, %s83
    $region4: #{tpu_custom_call.1} parent=1 // loop_header_branch
      %20 = sbr.rel (%p18) target = $region8
    $region5: #{tpu_custom_call.1} parent=1 // loop_body
      %s22 = ssub.s32 %s17, 1
      %s23 = ssub.s32 %s17, 2
      %s24 = sadd.s32 %s17, 1
      %s25 = ssub.s32 %s17, %s24
      %p26 = scmp.eq.s32.totalorder %s25, 0
      %s28 = sadd.s32 %s27, 1
      %s29 = scalar_select %p26, %s27, %s28
      %p32 = pneg %p26
      %p33 = scmp.eq.s32.totalorder %s17, 1
      %p34 = por %p32, %p33
      %p35 = scmp.ne.s32.totalorder %s27, %s30
      %p36 = scmp.eq.s32.totalorder %s17, 0
      %p37 = por %p35, %p36
      %p38 = scmp.ne.s32.totalorder %s27, %s30
      %p39 = scmp.eq.s32.totalorder %s22, 1
      %p40 = por %p38, %p39
      %p41 = scmp.ne.s32.totalorder %s30, %s31
      %p42 = scmp.eq.s32.totalorder %s22, 0
      %p43 = por %p41, %p42
      %p44 = scmp.ne.s32.totalorder %s30, %s31
      %p45 = scmp.eq.s32.totalorder %s23, 1
      %p46 = por %p44, %p45
      %p48 = scmp.ne.s32.totalorder %s31, %s47
      %p49 = scmp.eq.s32.totalorder %s23, 0
      %p50 = por %p48, %p49
      %s51 = ssub.s32 %s17, %s24
      %p52 = scmp.eq.s32.totalorder %s51, 0
      %s54 = sadd.s32 %s53, 1
      %s55 = scalar_select %p52, %s53, %s54
      %p58 = pneg %p52
      %p59 = scmp.eq.s32.totalorder %s17, 1
      %p60 = por %p58, %p59
      %p61 = scmp.ne.s32.totalorder %s53, %s56
      %p62 = scmp.eq.s32.totalorder %s17, 0
      %p63 = por %p61, %p62
      %p64 = scmp.ne.s32.totalorder %s53, %s56
      %p65 = scmp.eq.s32.totalorder %s22, 1
      %p66 = por %p64, %p65
      %p67 = scmp.ne.s32.totalorder %s56, %s57
      %p68 = scmp.eq.s32.totalorder %s22, 0
      %p69 = por %p67, %p68
      %p70 = scmp.ne.s32.totalorder %s56, %s57
      %p71 = scmp.eq.s32.totalorder %s23, 1
      %p72 = por %p70, %p71
      %p74 = scmp.ne.s32.totalorder %s57, %s73
      %p75 = scmp.eq.s32.totalorder %s23, 0
      %p76 = por %p74, %p75
      %s77 = ssub.s32 %s17, %s24
      %p78 = scmp.eq.s32.totalorder %s77, 0
      %s80 = sadd.s32 %s79, 1
      %s81 = scalar_select %p78, %s79, %s80
      %p84 = pneg %p78
      %p85 = scmp.eq.s32.totalorder %s17, 1
      %p86 = por %p84, %p85
      %p87 = scmp.ne.s32.totalorder %s79, %s82
      %p88 = scmp.eq.s32.totalorder %s17, 0
      %p89 = por %p87, %p88
      %p90 = scmp.ne.s32.totalorder %s79, %s82
      %p91 = scmp.eq.s32.totalorder %s22, 1
      %p92 = por %p90, %p91
      %p93 = scmp.ne.s32.totalorder %s82, %s83
      %p94 = scmp.eq.s32.totalorder %s22, 0
      %p95 = por %p93, %p94
      %p96 = scmp.ne.s32.totalorder %s82, %s83
      %p97 = scmp.eq.s32.totalorder %s23, 1
      %p98 = por %p96, %p97
      %p100 = scmp.ne.s32.totalorder %s83, %s99
      %p101 = scmp.eq.s32.totalorder %s23, 0
      %p102 = por %p100, %p101
      %p103 = scmp.le.s32.totalorder 1, %s17
      %p104 = scmp.lt.s32.totalorder %s17, 3
      %p105 = pnand %p103, %p104
      %p106 = pneg %p105
      // Predicated region
      $region9: #{tpu_custom_call.1} parent=5 // pred_check
        _
      $region10: #{tpu_custom_call.1} parent=5 // pred_check_branch
        %108 = sbr.rel (%p105) target = $region12
      $region11: #{tpu_custom_call.1} parent=5 // pred_region
        %s109 = ssub.s32 %s17, 1
      $region12: #{tpu_custom_call.1} parent=5 // pred_fallthru
        _
      %p110 = scmp.lt.s32.totalorder %s17, 2
      // Predicated region
      $region13: #{tpu_custom_call.1} parent=5 // pred_check
        %p111 = pneg %p110
      $region14: #{tpu_custom_call.1} parent=5 // pred_check_branch
        %113 = sbr.rel (%p111) target = $region16
      $region15: #{tpu_custom_call.1} parent=5 // pred_region
        // Predicated region
        $region17: #{tpu_custom_call.1} parent=15 // pred_check
          %p114 = pneg %p37
        $region18: #{tpu_custom_call.1} parent=15 // pred_check_branch
          %116 = sbr.rel (%p114) target = $region20
        $region19: #{tpu_custom_call.1} parent=15 // pred_region
          %s117 = sand.u32 %s27, 1
          %s118 = scalar_lea.sflag [#allocation3], %s117
          %s119 = sand.u32 %s27, 1
          %s120 = smul.addr %s119, 32
          %s121 = scalar_lea.vmem [#allocation2], %s120
          %s123 = ssub.s32 512, 512
          %124 = vsyncadd %s118, %s123
          %s125 = smul.addr %s17, 4
          %s126 = smul.addr %s125, 128
          %s127 = scalar_lea.hbm %s0, %s126
          %s128 = sshll.u32 %s121, 4
          %s129 = int_to_ptr.vmem [resolvable:$true] %s128
          %134 = dma.hbm_to_vmem [thread:$0]  %s127, 512, %s129, %s118, 128, 128, 8
        $region20: #{tpu_custom_call.1} parent=15 // pred_fallthru
          _
        // Predicated region
        $region21: #{tpu_custom_call.1} parent=15 // pred_check
          %p135 = pneg %p63
        $region22: #{tpu_custom_call.1} parent=15 // pred_check_branch
          %137 = sbr.rel (%p135) target = $region24
        $region23: #{tpu_custom_call.1} parent=15 // pred_region
          %s138 = sand.u32 %s53, 1
          %s139 = scalar_lea.sflag [#allocation6], %s138
          %s140 = sand.u32 %s53, 1
          %s141 = smul.addr %s140, 8
          %s142 = scalar_lea.vmem [#allocation5], %s141
          %s144 = ssub.s32 128, 128
          %145 = vsyncadd %s139, %s144
          %s146 = smul.addr %s17, 128
          %s147 = scalar_lea.hbm %s1, %s146
          %s149 = sshll.u32 %s142, 4
          %s150 = int_to_ptr.vmem [resolvable:$true] %s149
          %152 = dma.hbm_to_vmem [thread:$0]  %s147, 128, %s150, %s139
        $region24: #{tpu_custom_call.1} parent=15 // pred_fallthru
          _
      $region16: #{tpu_custom_call.1} parent=5 // pred_fallthru
        _
      %p153 = scmp.le.s32.totalorder 1, %s17
      %p154 = scmp.lt.s32.totalorder %s17, 3
      %p155 = pnand %p153, %p154
      %p156 = pneg %p155
      // Predicated region
      $region25: #{tpu_custom_call.1} parent=5 // pred_check
        _
      $region26: #{tpu_custom_call.1} parent=5 // pred_check_branch
        %158 = sbr.rel (%p155) target = $region28
      $region27: #{tpu_custom_call.1} parent=5 // pred_region
        %s159 = ssub.s32 %s17, 1
        %s160 = sand.u32 %s30, 1
        %s161 = scalar_lea.sflag [#allocation3], %s160
        %s162 = sand.u32 %s30, 1
        %s163 = smul.addr %s162, 32
        %s164 = scalar_lea.vmem [#allocation2], %s163
        // Predicated region
        $region29: #{tpu_custom_call.1} parent=27 // pred_check
          %p165 = pneg %p43
        $region30: #{tpu_custom_call.1} parent=27 // pred_check_branch
          %167 = sbr.rel (%p165) target = $region32
        $region31: #{tpu_custom_call.1} parent=27 // pred_region
          %168 = dma.done %s161, 512
        $region32: #{tpu_custom_call.1} parent=27 // pred_fallthru
          _
        %s169 = sand.u32 %s56, 1
        %s170 = scalar_lea.sflag [#allocation6], %s169
        %s171 = sand.u32 %s56, 1
        %s172 = smul.addr %s171, 8
        %s173 = scalar_lea.vmem [#allocation5], %s172
        // Predicated region
        $region33: #{tpu_custom_call.1} parent=27 // pred_check
          %p174 = pneg %p69
        $region34: #{tpu_custom_call.1} parent=27 // pred_check_branch
          %176 = sbr.rel (%p174) target = $region36
        $region35: #{tpu_custom_call.1} parent=27 // pred_region
          %177 = dma.done %s170, 128
        $region36: #{tpu_custom_call.1} parent=27 // pred_fallthru
          _
        %s178 = sand.u32 %s30, 1
        %s179 = scalar_lea.sflag [#allocation3], %s178
        %s180 = sand.u32 %s30, 1
        %s181 = smul.addr %s180, 32
        %s182 = scalar_lea.vmem [#allocation2], %s181
        %p183 = pneg %p43
        %p184 = pneg %p40
        %s185 = sand.u32 %s56, 1
        %s186 = scalar_lea.sflag [#allocation6], %s185
        %s187 = sand.u32 %s56, 1
        %s188 = smul.addr %s187, 8
        %s189 = scalar_lea.vmem [#allocation5], %s188
        %p190 = pneg %p69
        %p191 = pneg %p66
        %p192 = pneg %p95
        %p193 = pneg %p92
        %s194 = sand.u32 %s82, 1
        %s195 = scalar_lea.sflag [#allocation4], %s194
        %s196 = sand.u32 %s82, 1
        %s197 = scalar_lea.vmem [#allocation7], %s196
        %v198 = vld [vmem:[%s164] sm:$0xff]
        %v199 = vld [vmem:[%s164 + $0x8] sm:$0xff]
        %v200 = vld [vmem:[%s164 + $0x10] sm:$0xff]
        %v201 = vld [vmem:[%s164 + $0x18] sm:$0xff]
        %v202 = vld [vmem:[%s173] sm:$0xff]
        %203 = vadd.xlane.f32.xlu0 %v198
        %v204 = vpop.xlane.xlu0 %203
        %205 = vadd.xlane.f32.xlu0 %v199
        %v206 = vpop.xlane.xlu0 %205
        %207 = vadd.xlane.f32.xlu0 %v200
        %v208 = vpop.xlane.xlu0 %207
        %209 = vadd.xlane.f32.xlu0 %v201
        %v210 = vpop.xlane.xlu0 %209
        %v211 = vrot.slane %v204, 4
        %v212 = vadd.f32 %v204, %v211
        %v213 = vrot.slane %v212, 2
        %v214 = vadd.f32 %v212, %v213
        %v215 = vrot.slane %v214, 1
        %v216 = vadd.f32 %v214, %v215
        %v217 = vrot.slane %v206, 4
        %v218 = vadd.f32 %v206, %v217
        %v219 = vrot.slane %v218, 2
        %v220 = vadd.f32 %v218, %v219
        %v221 = vrot.slane %v220, 1
        %v222 = vadd.f32 %v220, %v221
        %v223 = vrot.slane %v208, 4
        %v224 = vadd.f32 %v208, %v223
        %v225 = vrot.slane %v224, 2
        %v226 = vadd.f32 %v224, %v225
        %v227 = vrot.slane %v226, 1
        %v228 = vadd.f32 %v226, %v227
        %v229 = vrot.slane %v210, 4
        %v230 = vadd.f32 %v210, %v229
        %v231 = vrot.slane %v230, 2
        %v232 = vadd.f32 %v230, %v231
        %v233 = vrot.slane %v232, 1
        %v234 = vadd.f32 %v232, %v233
        %v235 = vmul.f32 %v198, %v198
        %v236 = vmul.f32 %v199, %v199
        %v237 = vmul.f32 %v200, %v200
        %v238 = vmul.f32 %v201, %v201
        %239 = vadd.xlane.f32.xlu0 %v235
        %v240 = vpop.xlane.xlu0 %239
        %241 = vadd.xlane.f32.xlu0 %v236
        %v242 = vpop.xlane.xlu0 %241
        %243 = vadd.xlane.f32.xlu0 %v237
        %v244 = vpop.xlane.xlu0 %243
        %245 = vadd.xlane.f32.xlu0 %v238
        %v246 = vpop.xlane.xlu0 %245
        %v247 = vrot.slane %v240, 4
        %v248 = vadd.f32 %v240, %v247
        %v249 = vrot.slane %v248, 2
        %v250 = vadd.f32 %v248, %v249
        %v251 = vrot.slane %v250, 1
        %v252 = vadd.f32 %v250, %v251
        %v253 = vrot.slane %v242, 4
        %v254 = vadd.f32 %v242, %v253
        %v255 = vrot.slane %v254, 2
        %v256 = vadd.f32 %v254, %v255
        %v257 = vrot.slane %v256, 1
        %v258 = vadd.f32 %v256, %v257
        %v259 = vrot.slane %v244, 4
        %v260 = vadd.f32 %v244, %v259
        %v261 = vrot.slane %v260, 2
        %v262 = vadd.f32 %v260, %v261
        %v263 = vrot.slane %v262, 1
        %v264 = vadd.f32 %v262, %v263
        %v265 = vrot.slane %v246, 4
        %v266 = vadd.f32 %v246, %v265
        %v267 = vrot.slane %v266, 2
        %v268 = vadd.f32 %v266, %v267
        %v269 = vrot.slane %v268, 1
        %v270 = vadd.f32 %v268, %v269
        %v271 = vmul.f32 %v198, %v202
        %v272 = vmul.f32 %v199, %v202
        %v273 = vmul.f32 %v200, %v202
        %v274 = vmul.f32 %v201, %v202
        %275 = vadd.xlane.f32.xlu0 %v271
        %v276 = vpop.xlane.xlu0 %275
        %277 = vadd.xlane.f32.xlu0 %v272
        %v278 = vpop.xlane.xlu0 %277
        %279 = vadd.xlane.f32.xlu0 %v273
        %v280 = vpop.xlane.xlu0 %279
        %281 = vadd.xlane.f32.xlu0 %v274
        %v282 = vpop.xlane.xlu0 %281
        %v283 = vrot.slane %v276, 4
        %v284 = vadd.f32 %v276, %v283
        %v285 = vrot.slane %v284, 2
        %v286 = vadd.f32 %v284, %v285
        %v287 = vrot.slane %v286, 1
        %v288 = vadd.f32 %v286, %v287
        %v289 = vrot.slane %v278, 4
        %v290 = vadd.f32 %v278, %v289
        %v291 = vrot.slane %v290, 2
        %v292 = vadd.f32 %v290, %v291
        %v293 = vrot.slane %v292, 1
        %v294 = vadd.f32 %v292, %v293
        %v295 = vrot.slane %v280, 4
        %v296 = vadd.f32 %v280, %v295
        %v297 = vrot.slane %v296, 2
        %v298 = vadd.f32 %v296, %v297
        %v299 = vrot.slane %v298, 1
        %v300 = vadd.f32 %v298, %v299
        %v301 = vrot.slane %v282, 4
        %v302 = vadd.f32 %v282, %v301
        %v303 = vrot.slane %v302, 2
        %v304 = vadd.f32 %v302, %v303
        %v305 = vrot.slane %v304, 1
        %v306 = vadd.f32 %v304, %v305
        %307 = vadd.xlane.f32.xlu0 %v202
        %v308 = vpop.xlane.xlu0 %307
        %v309 = vrot.slane %v308, 4
        %v310 = vadd.f32 %v308, %v309
        %v311 = vrot.slane %v310, 2
        %v312 = vadd.f32 %v310, %v311
        %v313 = vrot.slane %v312, 1
        %v314 = vadd.f32 %v312, %v313
        %v315 = vmul.f32 %v202, %v202
        %316 = vadd.xlane.f32.xlu0 %v315
        %v317 = vpop.xlane.xlu0 %316
        %v318 = vrot.slane %v317, 4
        %v319 = vadd.f32 %v317, %v318
        %v320 = vrot.slane %v319, 2
        %v321 = vadd.f32 %v319, %v320
        %v322 = vrot.slane %v321, 1
        %v323 = vadd.f32 %v321, %v322
        %324 = vmax.xlane.f32.xlu0 %v198
        %v325 = vpop.xlane.xlu0 %324
        %326 = vmax.xlane.f32.xlu0 %v199
        %v327 = vpop.xlane.xlu0 %326
        %328 = vmax.xlane.f32.xlu0 %v200
        %v329 = vpop.xlane.xlu0 %328
        %330 = vmax.xlane.f32.xlu0 %v201
        %v331 = vpop.xlane.xlu0 %330
        %v332 = vrot.slane %v325, 4
        %v333 = vmax.f32 %v325, %v332
        %v334 = vrot.slane %v333, 2
        %v335 = vmax.f32 %v333, %v334
        %v336 = vrot.slane %v335, 1
        %v337 = vmax.f32 %v335, %v336
        %v338 = vrot.slane %v327, 4
        %v339 = vmax.f32 %v327, %v338
        %v340 = vrot.slane %v339, 2
        %v341 = vmax.f32 %v339, %v340
        %v342 = vrot.slane %v341, 1
        %v343 = vmax.f32 %v341, %v342
        %v344 = vrot.slane %v329, 4
        %v345 = vmax.f32 %v329, %v344
        %v346 = vrot.slane %v345, 2
        %v347 = vmax.f32 %v345, %v346
        %v348 = vrot.slane %v347, 1
        %v349 = vmax.f32 %v347, %v348
        %v350 = vrot.slane %v331, 4
        %v351 = vmax.f32 %v331, %v350
        %v352 = vrot.slane %v351, 2
        %v353 = vmax.f32 %v351, %v352
        %v354 = vrot.slane %v353, 1
        %v355 = vmax.f32 %v353, %v354
        %v356 = vmul.f32 %v216, 0.0009765625
        %v357 = vmul.f32 %v222, 0.0009765625
        %v358 = vmul.f32 %v228, 0.0009765625
        %v359 = vmul.f32 %v234, 0.0009765625
        %v360 = vmul.f32 %v314, 0.0009765625
        %v361 = vmul.f32 %v252, 0.0009765625
        %v362 = vmul.f32 %v258, 0.0009765625
        %v363 = vmul.f32 %v264, 0.0009765625
        %v364 = vmul.f32 %v270, 0.0009765625
        %v365 = vmul.f32 %v356, %v356
        %v366 = vmul.f32 %v357, %v357
        %v367 = vmul.f32 %v358, %v358
        %v368 = vmul.f32 %v359, %v359
        %v369 = vsub.f32 %v361, %v365
        %v370 = vsub.f32 %v362, %v366
        %v371 = vsub.f32 %v363, %v367
        %v372 = vsub.f32 %v364, %v368
        %v373 = vmul.f32 %v323, 0.0009765625
        %v374 = vmul.f32 %v360, %v360
        %v375 = vsub.f32 %v373, %v374
        %v376 = vadd.f32 %v369, 1e-05
        %v377 = vadd.f32 %v370, 1e-05
        %v378 = vadd.f32 %v371, 1e-05
        %v379 = vadd.f32 %v372, 1e-05
        %v380 = vrsqrt.pop %v376
        %v381 = vrsqrt.pop %v377
        %v382 = vrsqrt.pop %v378
        %v383 = vrsqrt.pop %v379
        %v384 = vadd.f32 %v375, 1e-05
        %v385 = vrsqrt.pop %v384
        %v386 = vmul.f32 %v356, %v360
        %v387 = vmul.f32 %v357, %v360
        %v388 = vmul.f32 %v358, %v360
        %v389 = vmul.f32 %v359, %v360
        %v390 = vmul.f32 %v386, 1024.0
        %v391 = vmul.f32 %v387, 1024.0
        %v392 = vmul.f32 %v388, 1024.0
        %v393 = vmul.f32 %v389, 1024.0
        %v394 = vsub.f32 %v288, %v390
        %v395 = vsub.f32 %v294, %v391
        %v396 = vsub.f32 %v300, %v392
        %v397 = vsub.f32 %v306, %v393
        %v398 = vmul.f32 %v380, %v385
        %v399 = vmul.f32 %v381, %v385
        %v400 = vmul.f32 %v382, %v385
        %v401 = vmul.f32 %v383, %v385
        %v402 = vmul.f32 %v394, %v398
        %v403 = vmul.f32 %v395, %v399
        %v404 = vmul.f32 %v396, %v400
        %v405 = vmul.f32 %v397, %v401
        %v406 = vmul.f32 %v365, 1024.0
        %v407 = vmul.f32 %v366, 1024.0
        %v408 = vmul.f32 %v367, 1024.0
        %v409 = vmul.f32 %v368, 1024.0
        %v410 = vsub.f32 %v252, %v406
        %v411 = vsub.f32 %v258, %v407
        %v412 = vsub.f32 %v264, %v408
        %v413 = vsub.f32 %v270, %v409
        %v414 = vmul.f32 %v380, %v380
        %v415 = vmul.f32 %v381, %v381
        %v416 = vmul.f32 %v382, %v382
        %v417 = vmul.f32 %v383, %v383
        %v418 = vmul.f32 %v410, %v414
        %v419 = vmul.f32 %v411, %v415
        %v420 = vmul.f32 %v412, %v416
        %v421 = vmul.f32 %v413, %v417
        %v422 = vmul.f32 %v374, 1024.0
        %v423 = vsub.f32 %v323, %v422
        %v424 = vmul.f32 %v385, %v385
        %v425 = vmul.f32 %v423, %v424
        %v426 = vmul.f32 %v418, %v425
        %v427 = vmul.f32 %v419, %v425
        %v428 = vmul.f32 %v420, %v425
        %v429 = vmul.f32 %v421, %v425
        %v430 = vrsqrt.pop %v426
        %v431 = vmul.f32 %v426, %v430
        %vm432 = vcmp.eq.f32.partialorder %v426, inf
        %v433 = vsel %vm432, %v426, %v431
        %vm434 = vcmp.eq.f32.partialorder %v426, 0.0
        %v435 = vand.u32 %v426, 2147483648
        %v436 = vsel %vm434, %v435, %v433
        %v437 = vrsqrt.pop %v427
        %v438 = vmul.f32 %v427, %v437
        %vm439 = vcmp.eq.f32.partialorder %v427, inf
        %v440 = vsel %vm439, %v427, %v438
        %vm441 = vcmp.eq.f32.partialorder %v427, 0.0
        %v442 = vand.u32 %v427, 2147483648
        %v443 = vsel %vm441, %v442, %v440
        %v444 = vrsqrt.pop %v428
        %v445 = vmul.f32 %v428, %v444
        %vm446 = vcmp.eq.f32.partialorder %v428, inf
        %v447 = vsel %vm446, %v428, %v445
        %vm448 = vcmp.eq.f32.partialorder %v428, 0.0
        %v449 = vand.u32 %v428, 2147483648
        %v450 = vsel %vm448, %v449, %v447
        %v451 = vrsqrt.pop %v429
        %v452 = vmul.f32 %v429, %v451
        %vm453 = vcmp.eq.f32.partialorder %v429, inf
        %v454 = vsel %vm453, %v429, %v452
        %vm455 = vcmp.eq.f32.partialorder %v429, 0.0
        %v456 = vand.u32 %v429, 2147483648
        %v457 = vsel %vm455, %v456, %v454
        %v458 = vadd.f32 %v436, 1e-06
        %v459 = vadd.f32 %v443, 1e-06
        %v460 = vadd.f32 %v450, 1e-06
        %v461 = vadd.f32 %v457, 1e-06
        %v462 = vrcp.pop %v458
        %v463 = vmul.f32 %v402, %v462
        %v464 = vrcp.pop %v459
        %v465 = vmul.f32 %v403, %v464
        %v466 = vrcp.pop %v460
        %v467 = vmul.f32 %v404, %v466
        %v468 = vrcp.pop %v461
        %v469 = vmul.f32 %v405, %v468
        %v470 = vadd.f32 %v463, 0.0
        %v471 = vadd.f32 %v465, 0.0
        %v472 = vadd.f32 %v467, 0.0
        %v473 = vadd.f32 %v469, 0.0
        %v474 = vadd.f32 %v470, 0.0
        %v475 = vadd.f32 %v471, 0.0
        %v476 = vadd.f32 %v472, 0.0
        %v477 = vadd.f32 %v473, 0.0
        %v478 = vadd.f32 %v474, %v475
        %v479 = vadd.f32 %v478, %v476
        %v480 = vadd.f32 %v479, %v477
        %v481 = vadd.f32 %v480, 0.0
        %v482 = vrcp.pop %v337
        %v483 = vmul.f32 1.0, %v482
        %v484 = vrcp.pop %v343
        %v485 = vmul.f32 1.0, %v484
        %v486 = vrcp.pop %v349
        %v487 = vmul.f32 1.0, %v486
        %v488 = vrcp.pop %v355
        %v489 = vmul.f32 1.0, %v488
        %v490 = vmul.f32 %v216, %v483
        %v491 = vmul.f32 %v222, %v485
        %v492 = vmul.f32 %v228, %v487
        %v493 = vmul.f32 %v234, %v489
        %v494 = vrcp.pop %v490
        %v495 = vmul.f32 1.0, %v494
        %v496 = vrcp.pop %v491
        %v497 = vmul.f32 1.0, %v496
        %v498 = vrcp.pop %v492
        %v499 = vmul.f32 1.0, %v498
        %v500 = vrcp.pop %v493
        %v501 = vmul.f32 1.0, %v500
        %v502 = vrcp.pop %v314
        %v503 = vmul.f32 1.0, %v502
        %v504 = vmul.f32 %v198, %v483
        %v505 = vmul.f32 %v199, %v485
        %v506 = vmul.f32 %v200, %v487
        %v507 = vmul.f32 %v201, %v489
        %v508 = vmul.f32 %v504, %v495
        %v509 = vmul.f32 %v505, %v497
        %v510 = vmul.f32 %v506, %v499
        %v511 = vmul.f32 %v507, %v501
        %v512 = vmul.f32 %v202, %v503
        %v513 = vadd.f32 %v512, 1e-06
        %v514 = vrcp.pop %v513
        %v515 = vmul.f32 1.0, %v514
        %v516 = vadd.f32 %v508, 1e-06
        %v517 = vadd.f32 %v509, 1e-06
        %v518 = vadd.f32 %v510, 1e-06
        %v519 = vadd.f32 %v511, 1e-06
        %v520 = vrcp.pop %v516
        %v521 = vmul.f32 %v512, %v520
        %v522 = vrcp.pop %v517
        %v523 = vmul.f32 %v512, %v522
        %v524 = vrcp.pop %v518
        %v525 = vmul.f32 %v512, %v524
        %v526 = vrcp.pop %v519
        %v527 = vmul.f32 %v512, %v526
        %v528 = vadd.f32 %v521, 1e-06
        %v529 = vadd.f32 %v523, 1e-06
        %v530 = vadd.f32 %v525, 1e-06
        %v531 = vadd.f32 %v527, 1e-06
        %v532 = vlog2.pop %v528
        %v533 = vmul.f32 %v532, 0.6931472
        %v534 = vlog2.pop %v529
        %v535 = vmul.f32 %v534, 0.6931472
        %v536 = vlog2.pop %v530
        %v537 = vmul.f32 %v536, 0.6931472
        %v538 = vlog2.pop %v531
        %v539 = vmul.f32 %v538, 0.6931472
        %v540 = vmul.f32 %v512, %v533
        %v541 = vmul.f32 %v512, %v535
        %v542 = vmul.f32 %v512, %v537
        %v543 = vmul.f32 %v512, %v539
        %v544 = vmul.f32 %v508, %v515
        %v545 = vmul.f32 %v509, %v515
        %v546 = vmul.f32 %v510, %v515
        %v547 = vmul.f32 %v511, %v515
        %v548 = vadd.f32 %v544, 1e-06
        %v549 = vadd.f32 %v545, 1e-06
        %v550 = vadd.f32 %v546, 1e-06
        %v551 = vadd.f32 %v547, 1e-06
        %v552 = vlog2.pop %v548
        %v553 = vmul.f32 %v552, 0.6931472
        %v554 = vlog2.pop %v549
        %v555 = vmul.f32 %v554, 0.6931472
        %v556 = vlog2.pop %v550
        %v557 = vmul.f32 %v556, 0.6931472
        %v558 = vlog2.pop %v551
        %v559 = vmul.f32 %v558, 0.6931472
        %v560 = vmul.f32 %v508, %v553
        %v561 = vmul.f32 %v509, %v555
        %v562 = vmul.f32 %v510, %v557
        %v563 = vmul.f32 %v511, %v559
        %v564 = vadd.f32 %v540, %v560
        %v565 = vadd.f32 %v541, %v561
        %v566 = vadd.f32 %v542, %v562
        %v567 = vadd.f32 %v543, %v563
        %568 = vadd.xlane.f32.xlu0 %v564
        %v569 = vpop.xlane.xlu0 %568
        %570 = vadd.xlane.f32.xlu0 %v565
        %v571 = vpop.xlane.xlu0 %570
        %572 = vadd.xlane.f32.xlu0 %v566
        %v573 = vpop.xlane.xlu0 %572
        %574 = vadd.xlane.f32.xlu0 %v567
        %v575 = vpop.xlane.xlu0 %574
        %v576 = vrot.slane %v569, 4
        %v577 = vadd.f32 %v569, %v576
        %v578 = vrot.slane %v577, 2
        %v579 = vadd.f32 %v577, %v578
        %v580 = vrot.slane %v579, 1
        %v581 = vadd.f32 %v579, %v580
        %v582 = vrot.slane %v571, 4
        %v583 = vadd.f32 %v571, %v582
        %v584 = vrot.slane %v583, 2
        %v585 = vadd.f32 %v583, %v584
        %v586 = vrot.slane %v585, 1
        %v587 = vadd.f32 %v585, %v586
        %v588 = vrot.slane %v573, 4
        %v589 = vadd.f32 %v573, %v588
        %v590 = vrot.slane %v589, 2
        %v591 = vadd.f32 %v589, %v590
        %v592 = vrot.slane %v591, 1
        %v593 = vadd.f32 %v591, %v592
        %v594 = vrot.slane %v575, 4
        %v595 = vadd.f32 %v575, %v594
        %v596 = vrot.slane %v595, 2
        %v597 = vadd.f32 %v595, %v596
        %v598 = vrot.slane %v597, 1
        %v599 = vadd.f32 %v597, %v598
        %v600 = vadd.f32 %v581, %v587
        %v601 = vadd.f32 %v600, %v593
        %v602 = vadd.f32 %v601, %v599
        %v603 = vadd.f32 %v602, 0.0
        %v604 = vsub.f32 1.1, %v202
        %v605 = vrcp.pop %v604
        %v606 = vmul.f32 1.0, %v605
        %v607 = vsub.f32 %v504, %v202
        %v608 = vsub.f32 %v505, %v202
        %v609 = vsub.f32 %v506, %v202
        %v610 = vsub.f32 %v507, %v202
        %v611 = vmul.f32 %v607, %v607
        %v612 = vmul.f32 %v608, %v608
        %v613 = vmul.f32 %v609, %v609
        %v614 = vmul.f32 %v610, %v610
        %v615 = vmul.f32 %v611, %v606
        %v616 = vmul.f32 %v612, %v606
        %v617 = vmul.f32 %v613, %v606
        %v618 = vmul.f32 %v614, %v606
        %619 = vadd.xlane.f32.xlu0 %v615
        %v620 = vpop.xlane.xlu0 %619
        %621 = vadd.xlane.f32.xlu0 %v616
        %v622 = vpop.xlane.xlu0 %621
        %623 = vadd.xlane.f32.xlu0 %v617
        %v624 = vpop.xlane.xlu0 %623
        %625 = vadd.xlane.f32.xlu0 %v618
        %v626 = vpop.xlane.xlu0 %625
        %v627 = vrot.slane %v620, 4
        %v628 = vadd.f32 %v620, %v627
        %v629 = vrot.slane %v628, 2
        %v630 = vadd.f32 %v628, %v629
        %v631 = vrot.slane %v630, 1
        %v632 = vadd.f32 %v630, %v631
        %v633 = vrot.slane %v622, 4
        %v634 = vadd.f32 %v622, %v633
        %v635 = vrot.slane %v634, 2
        %v636 = vadd.f32 %v634, %v635
        %v637 = vrot.slane %v636, 1
        %v638 = vadd.f32 %v636, %v637
        %v639 = vrot.slane %v624, 4
        %v640 = vadd.f32 %v624, %v639
        %v641 = vrot.slane %v640, 2
        %v642 = vadd.f32 %v640, %v641
        %v643 = vrot.slane %v642, 1
        %v644 = vadd.f32 %v642, %v643
        %v645 = vrot.slane %v626, 4
        %v646 = vadd.f32 %v626, %v645
        %v647 = vrot.slane %v646, 2
        %v648 = vadd.f32 %v646, %v647
        %v649 = vrot.slane %v648, 1
        %v650 = vadd.f32 %v648, %v649
        %v651 = vadd.f32 %v632, %v638
        %v652 = vadd.f32 %v651, %v644
        %v653 = vadd.f32 %v652, %v650
        %v654 = vadd.f32 %v653, 0.0
        %v655 = vlaneseq
        %v656 = vand.u32 %v655, 127
        %vm657 = vcmp.eq.s32.totalorder %v656, 0
        %v658 = vsel %vm657, %v481, 0.0
        %vm659 = vcmp.eq.s32.totalorder %v656, 1
        %v660 = vsel %vm659, %v603, 0.0
        %v661 = vadd.f32 %v658, %v660
        %vm662 = vcmp.eq.s32.totalorder %v656, 2
        %v663 = vsel %vm662, %v654, 0.0
        %v664 = vadd.f32 %v661, %v663
        %665 = vst [vmem:[%s197] sm:$0x1] %v664
        %s666 = sand.u32 %s82, 1
        %s667 = scalar_lea.sflag [#allocation4], %s666
        %s668 = sand.u32 %s82, 1
        %s669 = scalar_lea.vmem [#allocation7], %s668
        // Predicated region
        $region37: #{tpu_custom_call.1} parent=27 // pred_check
          %p670 = pneg %p92
        $region38: #{tpu_custom_call.1} parent=27 // pred_check_branch
          %672 = sbr.rel (%p670) target = $region40
        $region39: #{tpu_custom_call.1} parent=27 // pred_region
          %s674 = ssub.s32 16, 16
          %675 = vsyncadd %s667, %s674
          %s676 = smul.addr %s22, 16
          %s677 = scalar_lea.hbm %s2, %s676
          %s679 = sshll.u32 %s669, 4
          %s680 = int_to_ptr.vmem [resolvable:$true] %s679
          %682 = dma.vmem_to_hbm [thread:$0]  %s680, 16, %s677, %s667
        $region40: #{tpu_custom_call.1} parent=27 // pred_fallthru
          _
      $region28: #{tpu_custom_call.1} parent=5 // pred_fallthru
        _
      %p683 = scmp.le.s32.totalorder 2, %s17
      // Predicated region
      $region41: #{tpu_custom_call.1} parent=5 // pred_check
        %p684 = pneg %p683
      $region42: #{tpu_custom_call.1} parent=5 // pred_check_branch
        %686 = sbr.rel (%p684) target = $region44
      $region43: #{tpu_custom_call.1} parent=5 // pred_region
        %s687 = ssub.s32 %s17, 2
        // Predicated region
        $region45: #{tpu_custom_call.1} parent=43 // pred_check
          %p688 = pneg %p98
        $region46: #{tpu_custom_call.1} parent=43 // pred_check_branch
          %690 = sbr.rel (%p688) target = $region48
        $region47: #{tpu_custom_call.1} parent=43 // pred_region
          %s691 = sand.u32 %s83, 1
          %s692 = scalar_lea.sflag [#allocation4], %s691
          %s693 = sand.u32 %s83, 1
          %s694 = scalar_lea.vmem [#allocation7], %s693
          %695 = dma.done %s692, 16
        $region48: #{tpu_custom_call.1} parent=43 // pred_fallthru
          _
      $region44: #{tpu_custom_call.1} parent=5 // pred_fallthru
        _
    $region6: #{tpu_custom_call.1} parent=1 // loop_footer
      %s21 = sadd.s32 1, %s17
    $region7: #{tpu_custom_call.1} parent=1 // loop_footer_branch
      %16 = sbr.rel target = $region3
    $region8: #{tpu_custom_call.1} parent=1 // loop_exit
      _
    %696 = vsyncpa [#allocation3], 1
    %s697 = scalar_lea.sflag [#allocation3], 1
    %698 = vsyncpa %s697, 1
    %699 = vsyncpa [#allocation6], 1
    %s700 = scalar_lea.sflag [#allocation6], 1
    %701 = vsyncpa %s700, 1
    %702 = vsyncpa [#allocation4], 1
    %s703 = scalar_lea.sflag [#allocation4], 1
    %704 = vsyncpa %s703, 1

</llo_original>
